<compile_context>
chip_gen: v6e
topology: v6e:2x2x1
jax: 0.10.0
libtpu: 0.0.40
codegen_flags: <defaults>
</compile_context>

<pallas_src>
import math
from typing import NamedTuple

import numpy as np
import jax
import jax.numpy as jnp
from jax.experimental import pallas as pl
from jax.experimental.pallas import tpu as pltpu


# ----------------------------------------------------------------------------
# Init-time (host, numpy) construction of H and freqmask — direct transcription
# of the PyTorch __init__ math.
# ----------------------------------------------------------------------------
def _prop_general(Fhh, Fvv, lamda, refidx, z):
    DiffLimMat = np.ones(Fhh.shape)
    lamdaeff = lamda / refidx
    DiffLimMat[Fhh ** 2.0 + Fvv ** 2.0 >= 1.0 / lamdaeff ** 2.0] = 0.0
    temp1 = 2.0 * math.pi * z / lamdaeff
    temp3 = (lamdaeff * Fvv) ** 2.0
    temp4 = (lamdaeff * Fhh) ** 2.0
    temp2 = (1.0 - temp3 - temp4).astype(np.complex128) ** 0.5
    H = np.exp(1j * temp1 * temp2)
    H[np.logical_not(DiffLimMat)] = 0
    return H


def _band_limit_transfer_function(pixelsize, z, lamda, Fvv, Fhh):
    hSize, vSize = Fvv.shape
    dU = (hSize * pixelsize) ** (-1.0)
    dV = (vSize * pixelsize) ** (-1.0)
    Ulimit = ((2.0 * dU * z) ** 2.0 + 1.0) ** (-0.5) / lamda
    Vlimit = ((2.0 * dV * z) ** 2.0 + 1.0) ** (-0.5) / lamda
    freqmask = ((Fvv ** 2.0 / Ulimit ** 2.0 + Fhh ** 2.0 * lamda ** 2.0 <= 1.0)
                & (Fvv ** 2.0 * lamda ** 2.0 + Fhh ** 2.0 / Vlimit ** 2.0 <= 1.0))
    return freqmask


class AngSpecMasks(NamedTuple):
    m_re2: jax.Array       # (1, 2N) f32: [Re, Re] per complex frequency
    m_im_next: jax.Array   # (1, 2N) f32: [-Im, 0]  (multiplies the lane+1 value)
    m_im_prev: jax.Array   # (1, 2N) f32: [0, +Im]  (multiplies the lane-1 value)
    mask_c: jax.Array      # (H, W) complex64: ifftshift(H*freqmask) (XLA fast path)
    H_c: jax.Array         # (H, W) complex64: original transfer function (reference)
    freqmask_c: jax.Array  # (H, W) complex64: band-limit mask (reference)


def make_ang_spec_masks(whole_dim, pixel_size, focal_length, wave_lambda,
                        refidx=1, use_freqmask=True):
    """Builds the pre-ifftshifted combined mask and its interleaved f32 streams."""
    NFv, NFh = whole_dim, whole_dim
    z = float(focal_length)
    Fs = 1.0 / pixel_size
    Fh = Fs / NFh * np.arange(-np.ceil((NFh - 1) / 2),
                              np.floor((NFh - 1) / 2) + 0.5)
    Fv = Fs / NFv * np.arange(-np.ceil((NFv - 1) / 2),
                              np.floor((NFv - 1) / 2) + 0.5)
    Fhh, Fvv = np.meshgrid(Fh, Fv)
    H = _prop_general(Fhh, Fvv, wave_lambda, refidx, z).astype(np.complex64)
    freqmask = _band_limit_transfer_function(pixel_size, z, wave_lambda, Fvv, Fhh)
    combined = H * freqmask.astype(np.complex64) if use_freqmask else H
    shifted = np.fft.ifftshift(combined)  # fold fftshift/ifftshift into the mask

    re = np.ascontiguousarray(shifted.real).astype(np.float32).reshape(-1)
    im = np.ascontiguousarray(shifted.imag).astype(np.float32).reshape(-1)
    two_n = 2 * re.size
    m_re2 = np.repeat(re, 2)                       # [Re0, Re0, Re1, Re1, ...]
    m_im_next = np.zeros(two_n, np.float32)
    m_im_next[0::2] = -im                          # pairs with the lane+1 neighbour
    m_im_prev = np.zeros(two_n, np.float32)
    m_im_prev[1::2] = im                           # pairs with the lane-1 neighbour

    return AngSpecMasks(
        m_re2=jnp.asarray(m_re2).reshape(1, -1),
        m_im_next=jnp.asarray(m_im_next).reshape(1, -1),
        m_im_prev=jnp.asarray(m_im_prev).reshape(1, -1),
        mask_c=jnp.asarray(shifted.astype(np.complex64)),
        H_c=jnp.asarray(H),
        freqmask_c=jnp.asarray(freqmask.astype(np.complex64)),
    )


# ----------------------------------------------------------------------------
# Pallas kernel: interleaved complex multiply of the spectrum by the combined
# transfer-function mask, on a flattened lane-dense (B, 2N) f32 stream.
#
#   o[2k]   = s[2k]*Re_k - s[2k+1]*Im_k
#   o[2k+1] = s[2k]*Im_k + s[2k+1]*Re_k
#
# The neighbouring-lane values are produced with two XLU lane rotations; the
# wrapped lanes at the block edges are zeroed by the mask streams, so the
# block-local rotation is exact (block width is always even).
# ----------------------------------------------------------------------------
def _cmul_interleaved_kernel(s_ref, md_ref, ma_ref, mb_ref, o_ref):
    s = s_ref[...]                 # (TB, TN) interleaved [re, im, re, im, ...]
    tn = s_ref.shape[-1]
    nbr_a = pltpu.roll(s, tn - 1, axis=1)   # one rotation direction
    nbr_b = pltpu.roll(s, 1, axis=1)        # the other direction
    o_ref[...] = s * md_ref[...] + nbr_a * ma_ref[...] + nbr_b * mb_ref[...]


_LANE_TILE_CAP = 65536            # lanes per block: 256 KiB f32 per mask row
_PLANE_ELEM_CAP = 1024 * 1024     # <= 4 MiB f32 per (tb, tn) data plane
_PALLAS_MIN_BYTES = 4 * 1024 * 1024  # below this, fused XLA wins (launch overhead)


def _pick_blocks(b, m):
    """Lane-dense block sizes for a (b, m) float32 elementwise problem."""
    if m % 128 == 0:
        cap = min(m, _LANE_TILE_CAP)
        if m >= 256:
            cap = min(cap, m // 2)   # keep >= 2 lane tiles so v7x megacore has work
        tn = 128
        t = 128
        while t <= cap:
            if m % t == 0:
                tn = t
            t += 128
    else:
        tn = m                       # full extent (only used for small fields)
    if b % 8 == 0:
        cap = min(b, max(8, (_PLANE_ELEM_CAP // tn) // 8 * 8))
        tb = 8
        t = 8
        while t <= cap:
            if b % t == 0:
                tb = t
            t += 8
    else:
        tb = b                       # full extent
    return tb, tn


def _vmem_limit_bytes():
    """Generation-aware scoped-VMEM budget (96 MiB on 128 MiB parts, 48 on v7x)."""
    cap = 64 * 1024 * 1024
    try:
        cap = pltpu.get_tpu_info().vmem_capacity_bytes
    except Exception:
        pass
    return int(max(32 * 1024 * 1024, min(96 * 1024 * 1024, (cap * 3) // 4)))


_ROLL_IS_NUMPY = None


def _roll_matches_numpy():
    """One-time probe: does pltpu.roll follow np.roll's shift direction?"""
    global _ROLL_IS_NUMPY
    if _ROLL_IS_NUMPY is None:
        def probe_kernel(x_ref, o_ref):
            o_ref[...] = pltpu.roll(x_ref[...], 1, axis=1)
        try:
            x = np.arange(8 * 128, dtype=np.float32).reshape(8, 128)
            y = pl.pallas_call(
                probe_kernel,
                out_shape=jax.ShapeDtypeStruct((8, 128), jnp.float32),
            )(jnp.asarray(x))
            _ROLL_IS_NUMPY = bool(np.allclose(np.asarray(y), np.roll(x, 1, 1)))
        except Exception:
            _ROLL_IS_NUMPY = True   # np.roll semantics is the documented behaviour
    return _ROLL_IS_NUMPY


def spectrum_mask_multiply(spec_il, m_re2, m_im_next, m_im_prev):
    """(B, 2N) interleaved spectrum times the (1, 2N) combined complex mask."""
    B, M = spec_il.shape
    assert M % 2 == 0 and m_re2.shape == (1, M)
    tb, tn = _pick_blocks(B, M)
    grid = (M // tn, B // tb)     # batch innermost: mask tiles fetched once/lane tile

    data_spec = pl.BlockSpec((tb, tn), lambda ni, bi: (bi, ni))
    mask_spec = pl.BlockSpec((1, tn), lambda ni, bi: (0, ni))

    # Match the mask streams to whichever way pltpu.roll rotates.
    if _roll_matches_numpy():
        ma, mb = m_im_next, m_im_prev   # roll(s, tn-1) -> lane+1, roll(s, 1) -> lane-1
    else:
        ma, mb = m_im_prev, m_im_next

    return pl.pallas_call(
        _cmul_interleaved_kernel,
        out_shape=jax.ShapeDtypeStruct((B, M), jnp.float32),
        grid_spec=pltpu.PrefetchScalarGridSpec(
            num_scalar_prefetch=0,
            grid=grid,
            in_specs=[data_spec, mask_spec, mask_spec, mask_spec],
            out_specs=data_spec,
        ),
        input_output_aliases={0: 0},   # reuse the spectrum buffer for the output
        compiler_params=pltpu.CompilerParams(
            dimension_semantics=("parallel", "parallel"),
            vmem_limit_bytes=_vmem_limit_bytes(),
        ),
    )(spec_il, m_re2, ma, mb)


# ----------------------------------------------------------------------------
# complex64 <-> interleaved-f32 views (zero-copy when the backend allows it).
# ----------------------------------------------------------------------------
_COMPLEX_BITCAST_OK = None


def _complex_bitcast_supported():
    global _COMPLEX_BITCAST_OK
    if _COMPLEX_BITCAST_OK is None:
        try:
            x = np.array([1.0 + 2.0j, -3.0 + 0.5j], np.complex64)
            y = jax.block_until_ready(
                jax.lax.bitcast_convert_type(jnp.asarray(x), jnp.float32))
            expect = np.stack([x.real, x.imag], axis=-1)
            _COMPLEX_BITCAST_OK = (tuple(y.shape) == (2, 2)
                                   and bool(np.allclose(np.asarray(y), expect)))
        except Exception:
            _COMPLEX_BITCAST_OK = False
    return _COMPLEX_BITCAST_OK


def _complex_to_interleaved(x):
    """(..., W) complex64 -> (..., 2W) f32 [re, im, ...]."""
    if _complex_bitcast_supported():
        f = jax.lax.bitcast_convert_type(x, jnp.float32)       # zero-copy view
    else:
        f = jnp.stack([jnp.real(x), jnp.imag(x)], axis=-1)      # one fused pass
    return f.reshape(*x.shape[:-1], 2 * x.shape[-1])


def _interleaved_to_complex(x):
    """(..., 2W) f32 [re, im, ...] -> (..., W) complex64."""
    pair = x.reshape(*x.shape[:-1], x.shape[-1] // 2, 2)
    if _complex_bitcast_supported():
        return jax.lax.bitcast_convert_type(pair, jnp.complex64)
    return jax.lax.complex(pair[..., 0], pair[..., 1])


def ang_spec_prop2_forward(waves, masks, *, use_pallas=None):
    """waves: (B, H, W) complex64 -> propagated field, (B, H, W) complex64."""
    B, Hd, Wd = waves.shape
    M = 2 * Hd * Wd
    # TODO(synk): 2-D FFT/IFFT have no Pallas TPU primitive; they run on XLA.
    spectrum = jnp.fft.fft2(waves)
    if use_pallas is None:
        # Small / unaligned problems: a fused XLA complex multiply moves the
        # same bytes with no custom-call launch or per-grid-step overhead.
        use_pallas = (B * M * 4 >= _PALLAS_MIN_BYTES) and (M % 128 == 0)
    if not use_pallas:
        return jnp.fft.ifft2(spectrum * masks.mask_c)
    spec_il = _complex_to_interleaved(spectrum).reshape(B, M)
    out_il = spectrum_mask_multiply(spec_il, masks.m_re2,
                                    masks.m_im_next, masks.m_im_prev)
    spectrum_z = _interleaved_to_complex(out_il.reshape(B, Hd, 2 * Wd))
    return jnp.fft.ifft2(spectrum_z)


if __name__ == "__main__":
    # Small deterministic example consistent with the module.
    whole_dim = 16
    pixel_size = 8e-6
    focal_length = 0.1
    wave_lambda = 532e-9
    refidx = 1
    batch = 2

    masks = make_ang_spec_masks(whole_dim, pixel_size, focal_length,
                                wave_lambda, refidx, use_freqmask=True)

    key = jax.random.PRNGKey(0)
    k_re, k_im = jax.random.split(key)
    wav_re = jax.random.normal(k_re, (batch, whole_dim, whole_dim), jnp.float32)
    wav_im = jax.random.normal(k_im, (batch, whole_dim, whole_dim), jnp.float32)
    waves = jax.lax.complex(wav_re, wav_im)

    # Force the Pallas path so the kernel is exercised (the tiny demo would
    # otherwise take the small-problem XLA fast path), and also run auto mode.
    out_pallas = ang_spec_prop2_forward(waves, masks, use_pallas=True)
    out_auto = ang_spec_prop2_forward(waves, masks)
    jax.block_until_ready((out_pallas, out_auto))

    # Reference: mirror the PyTorch forward step-for-step in plain JAX
    # (fftshift/ifftshift over all axes, like the torch.fft defaults).
    ref_spec = jnp.fft.fftshift(jnp.fft.fft2(waves))
    ref_spec = ref_spec * masks.H_c
    ref_spec = ref_spec * masks.freqmask_c
    ref = jnp.fft.ifft2(jnp.fft.ifftshift(ref_spec))

    for out in (out_pallas, out_auto):
        assert jnp.allclose(out.real, ref.real, atol=1e-4, rtol=1e-4)
        assert jnp.allclose(out.imag, ref.imag, atol=1e-4, rtol=1e-4)

    print("KERNEL_OK")
</pallas_src>

<mosaic_0001>
module attributes {stable_mosaic.version = 11 : i64} {
  func.func @probe_kernel(%arg0: memref<8x128xf32, #tpu.memory_space<vmem>>, %arg1: memref<8x128xf32, #tpu.memory_space<vmem>>) attributes {dimension_semantics = [], scalar_prefetch = 0 : i64, scratch_operands = 0 : i64, tpu.core_type = #tpu.core_type<tc>} {
    %c0 = arith.constant 0 : index
    %c0_0 = arith.constant 0 : index
    %0 = vector.load %arg0[%c0, %c0_0] : memref<8x128xf32, #tpu.memory_space<vmem>>, vector<8x128xf32>
    %c1_i32 = arith.constant 1 : i32
    %1 = tpu.dynamic_rotate %0 by %c1_i32 dim 1 : vector<8x128xf32>, i32 -> vector<8x128xf32>
    %c0_1 = arith.constant 0 : index
    %c0_2 = arith.constant 0 : index
    %2 = vector.load %arg1[%c0_1, %c0_2] : memref<8x128xf32, #tpu.memory_space<vmem>>, vector<8x128xf32>
    tpu.vector_store %arg1[%c0_1, %c0_2], %1 {strides = array<i32>} : memref<8x128xf32, #tpu.memory_space<vmem>>, vector<8x128xf32>,
    return
  }
}

module attributes {stable_mosaic.version = 11 : i64} {
  func.func @_cmul_interleaved_kernel(%arg0: i32, %arg1: i32, %arg2: memref<2x256xf32, #tpu.memory_space<vmem>>, %arg3: memref<1x256xf32, #tpu.memory_space<vmem>>, %arg4: memref<1x256xf32, #tpu.memory_space<vmem>>, %arg5: memref<1x256xf32, #tpu.memory_space<vmem>>, %arg6: memref<2x256xf32, #tpu.memory_space<vmem>>) attributes {dimension_semantics = [#tpu.dimension_semantics<parallel>, #tpu.dimension_semantics<parallel>], iteration_bounds = array<i64: 2, 1>, scalar_prefetch = 0 : i64, scratch_operands = 0 : i64, tpu.core_type = #tpu.core_type<tc>, window_params = [{transform_indices = @transform_0, window_bounds = array<i64: 2, 256>}, {transform_indices = @transform_1, window_bounds = array<i64: 1, 256>}, {transform_indices = @transform_2, window_bounds = array<i64: 1, 256>}, {transform_indices = @transform_3, window_bounds = array<i64: 1, 256>}, {transform_indices = @transform_4, window_bounds = array<i64: 2, 256>}]} {
    %c0 = arith.constant 0 : index
    %c0_0 = arith.constant 0 : index
    %0 = vector.load %arg2[%c0, %c0_0] : memref<2x256xf32, #tpu.memory_space<vmem>>, vector<2x256xf32>
    %c255_i32 = arith.constant 255 : i32
    %1 = tpu.dynamic_rotate %0 by %c255_i32 dim 1 : vector<2x256xf32>, i32 -> vector<2x256xf32>
    %c1_i32 = arith.constant 1 : i32
    %2 = tpu.dynamic_rotate %0 by %c1_i32 dim 1 : vector<2x256xf32>, i32 -> vector<2x256xf32>
    %c0_1 = arith.constant 0 : index
    %c0_2 = arith.constant 0 : index
    %3 = vector.load %arg3[%c0_1, %c0_2] : memref<1x256xf32, #tpu.memory_space<vmem>>, vector<1x256xf32>
    %4 = vector.broadcast %3 : vector<1x256xf32> to vector<2x256xf32>
    %5 = arith.mulf %0, %4 : vector<2x256xf32>
    %c0_3 = arith.constant 0 : index
    %c0_4 = arith.constant 0 : index
    %6 = vector.load %arg4[%c0_3, %c0_4] : memref<1x256xf32, #tpu.memory_space<vmem>>, vector<1x256xf32>
    %7 = vector.broadcast %6 : vector<1x256xf32> to vector<2x256xf32>
    %8 = arith.mulf %1, %7 : vector<2x256xf32>
    %9 = arith.addf %5, %8 : vector<2x256xf32>
    %c0_5 = arith.constant 0 : index
    %c0_6 = arith.constant 0 : index
    %10 = vector.load %arg5[%c0_5, %c0_6] : memref<1x256xf32, #tpu.memory_space<vmem>>, vector<1x256xf32>
    %11 = vector.broadcast %10 : vector<1x256xf32> to vector<2x256xf32>
    %12 = arith.mulf %2, %11 : vector<2x256xf32>
    %13 = arith.addf %9, %12 : vector<2x256xf32>
    %c0_7 = arith.constant 0 : index
    %c0_8 = arith.constant 0 : index
    %14 = vector.load %arg6[%c0_7, %c0_8] : memref<2x256xf32, #tpu.memory_space<vmem>>, vector<2x256xf32>
    tpu.vector_store %arg6[%c0_7, %c0_8], %13 {strides = array<i32>} : memref<2x256xf32, #tpu.memory_space<vmem>>, vector<2x256xf32>,
    return
  }
  func.func @transform_0(%arg0: i32, %arg1: i32) -> (i32, i32) {
    %c0_i32 = arith.constant 0 : i32
    return %arg1, %arg0 : i32, i32
  }
  func.func @transform_1(%arg0: i32, %arg1: i32) -> (i32, i32) {
    %c0_i32 = arith.constant 0 : i32
    %c0_i32_0 = arith.constant 0 : i32
    return %c0_i32, %arg0 : i32, i32
  }
  func.func @transform_2(%arg0: i32, %arg1: i32) -> (i32, i32) {
    %c0_i32 = arith.constant 0 : i32
    %c0_i32_0 = arith.constant 0 : i32
    return %c0_i32, %arg0 : i32, i32
  }
  func.func @transform_3(%arg0: i32, %arg1: i32) -> (i32, i32) {
    %c0_i32 = arith.constant 0 : i32
    %c0_i32_0 = arith.constant 0 : i32
    return %c0_i32, %arg0 : i32, i32
  }
  func.func @transform_4(%arg0: i32, %arg1: i32) -> (i32, i32) {
    %c0_i32 = arith.constant 0 : i32
    return %arg1, %arg0 : i32, i32
  }
}

</mosaic_0001>

<llo_original>
// kernel: tpu_custom_call.1
$region0: #{tpu_custom_call.1}
  #allocation0 [shape = 'u32[]', space=smem, size = 0x4, offset = 0x4, fixed_abs, tag = 'smem constant byte address 0x4 - core index']
  #allocation1 [shape = 'u32[144,128]{1,0:T(1,128)}', space=vmem, size = 0x12000, scoped, tag = 'internal scratch']
  %s0 = inlined_call_operand.hbm [shape: f32[8,128], index: 0, kind: input, shape index: {}]
  %s1 = inlined_call_operand.hbm [shape: f32[8,128], index: 1, kind: output, shape index: {}]
  %s2 = sld [smem:[#allocation0]]
  $region18: #{tpu_custom_call.1} parent=0
    _
  %s4 = ssub.s32 1, %s2
  %s5 = scalar_select 0, %s4, %s2
  $region1: #{tpu_custom_call.1} parent=0
    #allocation2 [shape = 'u8[4096]{0}', space=vmem, size = 0x1000, scoped, tag = 'input window, operand 0, single buffered']
    #allocation3 [shape = 's32[1]{0}', space=sflag, size = 0x4, scoped, tag = 'scoped memory for tpu_custom_call.1']
    #allocation4 [shape = 's32[1]{0}', space=sflag, size = 0x4, scoped, tag = 'scoped memory for tpu_custom_call.1']
    #allocation5 [shape = 'u8[4096]{0}', space=vmem, size = 0x1000, scoped, tag = 'output window, operand 0, single buffered']
    %6 = vsyncpa [#allocation3], 0
    %7 = vsyncpa [#allocation4], 0
    // Predicated region
    $region2: #{tpu_custom_call.1} parent=1 // pred_check
      _
    $region3: #{tpu_custom_call.1} parent=1 // pred_check_branch
      %9 = sbr.rel (0) target = $region5
    $region4: #{tpu_custom_call.1} parent=1 // pred_region
      %s11 = ssub.s32 128, 128
      %12 = vsyncadd [#allocation3], %s11
      %s14 = sshll.u32 [#allocation2], 4
      %s15 = int_to_ptr.vmem [resolvable:$true] %s14
      %17 = dma.hbm_to_vmem [thread:$0]  %s0, 128, %s15, [#allocation3]
    $region5: #{tpu_custom_call.1} parent=1 // pred_fallthru
      _
    // Predicated region
    $region6: #{tpu_custom_call.1} parent=1 // pred_check
      _
    $region7: #{tpu_custom_call.1} parent=1 // pred_check_branch
      %19 = sbr.rel (0) target = $region9
    $region8: #{tpu_custom_call.1} parent=1 // pred_region
      %20 = dma.done [#allocation3], 128
    $region9: #{tpu_custom_call.1} parent=1 // pred_fallthru
      _
    %v21 = vld [vmem:[#allocation2] sm:$0xff]
    %22 = vrot.lane.b32.xlu0 %v21, 1
    %v23 = vpop.permute.xlu0 %22
    %24 = vst [vmem:[#allocation5] sm:$0xff] %v23
    // Predicated region
    $region10: #{tpu_custom_call.1} parent=1 // pred_check
      _
    $region11: #{tpu_custom_call.1} parent=1 // pred_check_branch
      %26 = sbr.rel (0) target = $region13
    $region12: #{tpu_custom_call.1} parent=1 // pred_region
      %s28 = ssub.s32 128, 128
      %29 = vsyncadd [#allocation4], %s28
      %s31 = sshll.u32 [#allocation5], 4
      %s32 = int_to_ptr.vmem [resolvable:$true] %s31
      %34 = dma.vmem_to_hbm [thread:$0]  %s32, 128, %s1, [#allocation4]
    $region13: #{tpu_custom_call.1} parent=1 // pred_fallthru
      _
    // Predicated region
    $region14: #{tpu_custom_call.1} parent=1 // pred_check
      _
    $region15: #{tpu_custom_call.1} parent=1 // pred_check_branch
      %36 = sbr.rel (0) target = $region17
    $region16: #{tpu_custom_call.1} parent=1 // pred_region
      %37 = dma.done [#allocation4], 128
    $region17: #{tpu_custom_call.1} parent=1 // pred_fallthru
      _
    %38 = vsyncpa [#allocation3], 1
    %39 = vsyncpa [#allocation4], 1

// kernel: tpu_custom_call.1
$region0: #{tpu_custom_call.1}
  #allocation0 [shape = 'u32[]', space=smem, size = 0x4, offset = 0x4, fixed_abs, tag = 'smem constant byte address 0x4 - core index']
  #allocation1 [shape = 'u32[144,128]{1,0:T(1,128)}', space=vmem, size = 0x12000, scoped, tag = 'internal scratch']
  %s0 = inlined_call_operand.hbm [shape: f32[2,512], index: 0, kind: input, shape index: {}, may-alias: {0,4}]
  %s1 = inlined_call_operand.vmem [shape: f32[1,512], index: 1, kind: input, shape index: {}]
  %s2 = inlined_call_operand.vmem [shape: f32[1,512], index: 2, kind: input, shape index: {}]
  %s3 = inlined_call_operand.vmem [shape: f32[1,512], index: 3, kind: input, shape index: {}]
  %s4 = inlined_call_operand.hbm [shape: f32[2,512], index: 4, kind: output, shape index: {}, may-alias: {0,4}]
  %s5 = sld [smem:[#allocation0]]
  $region53: #{tpu_custom_call.1} parent=0
    _
  %s7 = ssub.s32 1, %s5
  %s8 = scalar_select 0, %s7, %s5
  $region1: #{tpu_custom_call.1} parent=0
    #allocation2 [shape = 'u8[4096]{0}', space=vmem, size = 0x1000, scoped, tag = 'input window, operand 0']
    #allocation3 [shape = 's32[2]{0}', space=sflag, size = 0x8, scoped, tag = 'scoped memory for tpu_custom_call.1']
    #allocation4 [shape = 's32[2]{0}', space=sflag, size = 0x8, scoped, tag = 'scoped memory for tpu_custom_call.1']
    #allocation5 [shape = 'u8[4096]{0}', space=vmem, size = 0x1000, scoped, tag = 'output window, operand 0']
    %9 = vsyncpa [#allocation3], 0
    %s10 = scalar_lea.sflag [#allocation3], 1
    %11 = vsyncpa %s10, 0
    %12 = vsyncpa [#allocation4], 0
    %s13 = scalar_lea.sflag [#allocation4], 1
    %14 = vsyncpa %s13, 0
    loop: start=0, step=1, limit=4
    $region2: #{tpu_custom_call.1} parent=1 // loop_pre_header
      _
    $region3: #{tpu_custom_call.1} parent=1 // loop_header
      %s16 = sphi 0, %s20
      %p17 = scmp.ge.s32.totalorder %s16, 4
      %s23 = sphi 0, %s35
      %s24 = sphi 0, %s31
      %s25 = sphi 0, %s23
      %s26 = sphi 0, %s24
      %s27 = sphi 0, %s25
      %s28 = sphi 0, %s26
      %s40 = sphi 0, %s42
      %s43 = sphi 0, %s40
      %s44 = sphi 0, %s43
      %s60 = sphi 0, %s44
      %s66 = sphi 0, %s68
      %s69 = sphi 0, %s66
      %s70 = sphi 0, %s69
      %s86 = sphi 0, %s70
      %s92 = sphi 0, %s94
      %s95 = sphi 0, %s92
      %s96 = sphi 0, %s95
      %s112 = sphi 0, %s96
      %s118 = sphi 0, %s120
      %s121 = sphi 0, %s118
      %s122 = sphi 0, %s121
      %s138 = sphi 0, %s122
      %s146 = sphi 0, %s148
      %s149 = sphi 0, %s146
      %s150 = sphi 0, %s149
      %s166 = sphi 0, %s150
    $region4: #{tpu_custom_call.1} parent=1 // loop_header_branch
      %19 = sbr.rel (%p17) target = $region8
    $region5: #{tpu_custom_call.1} parent=1 // loop_body
      %s21 = ssub.s32 %s16, 1
      %s22 = ssub.s32 %s16, 2
      %s29 = sadd.s32 1, %s24
      %p30 = scmp.ge.s32.totalorder %s29, 1
      %s31 = scalar_select %p30, 0, %s29
      %s32 = sadd.s32 1, %s23
      %s33 = scalar_select %p30, %s32, %s23
      %p34 = scmp.ge.s32.totalorder %s33, 2
      %s35 = scalar_select %p34, 0, %s33
      %s36 = ssub.s32 %s24, %s31
      %s37 = ssub.s32 %s23, %s35
      %s38 = sor.u32 %s36, %s37
      %p39 = scmp.eq.s32.totalorder %s38, 0
      %s41 = sadd.s32 %s40, 1
      %s42 = scalar_select %p39, %s40, %s41
      %p45 = pneg %p39
      %p46 = scmp.eq.s32.totalorder %s16, 1
      %p47 = por %p45, %p46
      %p48 = scmp.ne.s32.totalorder %s40, %s43
      %p49 = scmp.eq.s32.totalorder %s16, 0
      %p50 = por %p48, %p49
      %p51 = scmp.ne.s32.totalorder %s40, %s43
      %p52 = scmp.eq.s32.totalorder %s21, 1
      %p53 = por %p51, %p52
      %p54 = scmp.ne.s32.totalorder %s43, %s44
      %p55 = scmp.eq.s32.totalorder %s21, 0
      %p56 = por %p54, %p55
      %p57 = scmp.ne.s32.totalorder %s43, %s44
      %p58 = scmp.eq.s32.totalorder %s22, 1
      %p59 = por %p57, %p58
      %p61 = scmp.ne.s32.totalorder %s44, %s60
      %p62 = scmp.eq.s32.totalorder %s22, 0
      %p63 = por %p61, %p62
      %s64 = ssub.s32 %s23, %s35
      %p65 = scmp.eq.s32.totalorder %s64, 0
      %s67 = sadd.s32 %s66, 1
      %s68 = scalar_select %p65, %s66, %s67
      %p71 = pneg %p65
      %p72 = scmp.eq.s32.totalorder %s16, 1
      %p73 = por %p71, %p72
      %p74 = scmp.ne.s32.totalorder %s66, %s69
      %p75 = scmp.eq.s32.totalorder %s16, 0
      %p76 = por %p74, %p75
      %p77 = scmp.ne.s32.totalorder %s66, %s69
      %p78 = scmp.eq.s32.totalorder %s21, 1
      %p79 = por %p77, %p78
      %p80 = scmp.ne.s32.totalorder %s69, %s70
      %p81 = scmp.eq.s32.totalorder %s21, 0
      %p82 = por %p80, %p81
      %p83 = scmp.ne.s32.totalorder %s69, %s70
      %p84 = scmp.eq.s32.totalorder %s22, 1
      %p85 = por %p83, %p84
      %p87 = scmp.ne.s32.totalorder %s70, %s86
      %p88 = scmp.eq.s32.totalorder %s22, 0
      %p89 = por %p87, %p88
      %s90 = ssub.s32 %s23, %s35
      %p91 = scmp.eq.s32.totalorder %s90, 0
      %s93 = sadd.s32 %s92, 1
      %s94 = scalar_select %p91, %s92, %s93
      %p97 = pneg %p91
      %p98 = scmp.eq.s32.totalorder %s16, 1
      %p99 = por %p97, %p98
      %p100 = scmp.ne.s32.totalorder %s92, %s95
      %p101 = scmp.eq.s32.totalorder %s16, 0
      %p102 = por %p100, %p101
      %p103 = scmp.ne.s32.totalorder %s92, %s95
      %p104 = scmp.eq.s32.totalorder %s21, 1
      %p105 = por %p103, %p104
      %p106 = scmp.ne.s32.totalorder %s95, %s96
      %p107 = scmp.eq.s32.totalorder %s21, 0
      %p108 = por %p106, %p107
      %p109 = scmp.ne.s32.totalorder %s95, %s96
      %p110 = scmp.eq.s32.totalorder %s22, 1
      %p111 = por %p109, %p110
      %p113 = scmp.ne.s32.totalorder %s96, %s112
      %p114 = scmp.eq.s32.totalorder %s22, 0
      %p115 = por %p113, %p114
      %s116 = ssub.s32 %s23, %s35
      %p117 = scmp.eq.s32.totalorder %s116, 0
      %s119 = sadd.s32 %s118, 1
      %s120 = scalar_select %p117, %s118, %s119
      %p123 = pneg %p117
      %p124 = scmp.eq.s32.totalorder %s16, 1
      %p125 = por %p123, %p124
      %p126 = scmp.ne.s32.totalorder %s118, %s121
      %p127 = scmp.eq.s32.totalorder %s16, 0
      %p128 = por %p126, %p127
      %p129 = scmp.ne.s32.totalorder %s118, %s121
      %p130 = scmp.eq.s32.totalorder %s21, 1
      %p131 = por %p129, %p130
      %p132 = scmp.ne.s32.totalorder %s121, %s122
      %p133 = scmp.eq.s32.totalorder %s21, 0
      %p134 = por %p132, %p133
      %p135 = scmp.ne.s32.totalorder %s121, %s122
      %p136 = scmp.eq.s32.totalorder %s22, 1
      %p137 = por %p135, %p136
      %p139 = scmp.ne.s32.totalorder %s122, %s138
      %p140 = scmp.eq.s32.totalorder %s22, 0
      %p141 = por %p139, %p140
      %s142 = ssub.s32 %s24, %s31
      %s143 = ssub.s32 %s23, %s35
      %s144 = sor.u32 %s142, %s143
      %p145 = scmp.eq.s32.totalorder %s144, 0
      %s147 = sadd.s32 %s146, 1
      %s148 = scalar_select %p145, %s146, %s147
      %p151 = pneg %p145
      %p152 = scmp.eq.s32.totalorder %s16, 1
      %p153 = por %p151, %p152
      %p154 = scmp.ne.s32.totalorder %s146, %s149
      %p155 = scmp.eq.s32.totalorder %s16, 0
      %p156 = por %p154, %p155
      %p157 = scmp.ne.s32.totalorder %s146, %s149
      %p158 = scmp.eq.s32.totalorder %s21, 1
      %p159 = por %p157, %p158
      %p160 = scmp.ne.s32.totalorder %s149, %s150
      %p161 = scmp.eq.s32.totalorder %s21, 0
      %p162 = por %p160, %p161
      %p163 = scmp.ne.s32.totalorder %s149, %s150
      %p164 = scmp.eq.s32.totalorder %s22, 1
      %p165 = por %p163, %p164
      %p167 = scmp.ne.s32.totalorder %s150, %s166
      %p168 = scmp.eq.s32.totalorder %s22, 0
      %p169 = por %p167, %p168
      %p170 = scmp.le.s32.totalorder 1, %s16
      %p171 = scmp.lt.s32.totalorder %s16, 3
      %p172 = pnand %p170, %p171
      %p173 = pneg %p172
      // Predicated region
      $region9: #{tpu_custom_call.1} parent=5 // pred_check
        _
      $region10: #{tpu_custom_call.1} parent=5 // pred_check_branch
        %175 = sbr.rel (%p172) target = $region12
      $region11: #{tpu_custom_call.1} parent=5 // pred_region
        %s176 = ssub.s32 %s16, 1
      $region12: #{tpu_custom_call.1} parent=5 // pred_fallthru
        _
      %p177 = scmp.lt.s32.totalorder %s16, 2
      // Predicated region
      $region13: #{tpu_custom_call.1} parent=5 // pred_check
        %p178 = pneg %p177
      $region14: #{tpu_custom_call.1} parent=5 // pred_check_branch
        %180 = sbr.rel (%p178) target = $region16
      $region15: #{tpu_custom_call.1} parent=5 // pred_region
        // Predicated region
        $region17: #{tpu_custom_call.1} parent=15 // pred_check
          %p181 = pneg %p50
        $region18: #{tpu_custom_call.1} parent=15 // pred_check_branch
          %183 = sbr.rel (%p181) target = $region20
        $region19: #{tpu_custom_call.1} parent=15 // pred_region
          %s184 = sand.u32 %s40, 1
          %s185 = scalar_lea.sflag [#allocation3], %s184
          %s186 = sand.u32 %s40, 1
          %s187 = smul.addr %s186, 4
          %s188 = scalar_lea.vmem [#allocation2], %s187
          %s189 = smul.u32 2, %s23
          %s191 = ssub.s32 64, 64
          %192 = vsyncadd %s185, %s191
          %s193 = smul.addr %s24, 4
          %s194 = sadd.s32 %s189, %s193
          %s195 = smul.addr %s194, 32
          %s196 = scalar_lea.hbm %s0, %s195
          %s198 = sshll.u32 %s188, 4
          %s199 = int_to_ptr.vmem [resolvable:$true] %s198
          %201 = dma.hbm_to_vmem [thread:$0]  %s196, 64, %s199, %s185
        $region20: #{tpu_custom_call.1} parent=15 // pred_fallthru
          _
        // Predicated region
        $region21: #{tpu_custom_call.1} parent=15 // pred_check
          %p202 = pneg %p76
        $region22: #{tpu_custom_call.1} parent=15 // pred_check_branch
          %204 = sbr.rel (%p202) target = $region24
        $region23: #{tpu_custom_call.1} parent=15 // pred_region
          %s205 = smul.u32 2, %s23
          %p206 = scmp.lt.s32.totalorder %s205, 3
          %s207 = scalar_select %p206, %s205, 3
          %s208 = scalar_lea.vmem %s1, %s207
          %s209 = smul.u32 2, %s23
        $region24: #{tpu_custom_call.1} parent=15 // pred_fallthru
          _
        // Predicated region
        $region25: #{tpu_custom_call.1} parent=15 // pred_check
          %p210 = pneg %p102
        $region26: #{tpu_custom_call.1} parent=15 // pred_check_branch
          %212 = sbr.rel (%p210) target = $region28
        $region27: #{tpu_custom_call.1} parent=15 // pred_region
          %s213 = smul.u32 2, %s23
          %p214 = scmp.lt.s32.totalorder %s213, 3
          %s215 = scalar_select %p214, %s213, 3
          %s216 = scalar_lea.vmem %s2, %s215
          %s217 = smul.u32 2, %s23
        $region28: #{tpu_custom_call.1} parent=15 // pred_fallthru
          _
        // Predicated region
        $region29: #{tpu_custom_call.1} parent=15 // pred_check
          %p218 = pneg %p128
        $region30: #{tpu_custom_call.1} parent=15 // pred_check_branch
          %220 = sbr.rel (%p218) target = $region32
        $region31: #{tpu_custom_call.1} parent=15 // pred_region
          %s221 = smul.u32 2, %s23
          %p222 = scmp.lt.s32.totalorder %s221, 3
          %s223 = scalar_select %p222, %s221, 3
          %s224 = scalar_lea.vmem %s3, %s223
          %s225 = smul.u32 2, %s23
        $region32: #{tpu_custom_call.1} parent=15 // pred_fallthru
          _
      $region16: #{tpu_custom_call.1} parent=5 // pred_fallthru
        _
      %p226 = scmp.le.s32.totalorder 1, %s16
      %p227 = scmp.lt.s32.totalorder %s16, 3
      %p228 = pnand %p226, %p227
      %p229 = pneg %p228
      // Predicated region
      $region33: #{tpu_custom_call.1} parent=5 // pred_check
        _
      $region34: #{tpu_custom_call.1} parent=5 // pred_check_branch
        %231 = sbr.rel (%p228) target = $region36
      $region35: #{tpu_custom_call.1} parent=5 // pred_region
        %s232 = ssub.s32 %s16, 1
        %s233 = sand.u32 %s43, 1
        %s234 = scalar_lea.sflag [#allocation3], %s233
        %s235 = sand.u32 %s43, 1
        %s236 = smul.addr %s235, 4
        %s237 = scalar_lea.vmem [#allocation2], %s236
        // Predicated region
        $region37: #{tpu_custom_call.1} parent=35 // pred_check
          %p238 = pneg %p56
        $region38: #{tpu_custom_call.1} parent=35 // pred_check_branch
          %240 = sbr.rel (%p238) target = $region40
        $region39: #{tpu_custom_call.1} parent=35 // pred_region
          %241 = dma.done %s234, 64
        $region40: #{tpu_custom_call.1} parent=35 // pred_fallthru
          _
        %s242 = sand.u32 %s43, 1
        %s243 = scalar_lea.sflag [#allocation3], %s242
        %s244 = sand.u32 %s43, 1
        %s245 = smul.addr %s244, 4
        %s246 = scalar_lea.vmem [#allocation2], %s245
        %p247 = pneg %p56
        %p248 = pneg %p53
        %s249 = smul.u32 2, %s25
        %p250 = scmp.lt.s32.totalorder %s249, 3
        %s251 = scalar_select %p250, %s249, 3
        %s252 = scalar_lea.vmem %s1, %s251
        %p253 = pneg %p82
        %p254 = pneg %p79
        %s255 = smul.u32 2, %s25
        %p256 = scmp.lt.s32.totalorder %s255, 3
        %s257 = scalar_select %p256, %s255, 3
        %s258 = scalar_lea.vmem %s2, %s257
        %p259 = pneg %p108
        %p260 = pneg %p105
        %s261 = smul.u32 2, %s25
        %p262 = scmp.lt.s32.totalorder %s261, 3
        %s263 = scalar_select %p262, %s261, 3
        %s264 = scalar_lea.vmem %s3, %s263
        %p265 = pneg %p134
        %p266 = pneg %p131
        %p267 = pneg %p162
        %p268 = pneg %p159
        %s269 = sand.u32 %s149, 1
        %s270 = scalar_lea.sflag [#allocation4], %s269
        %s271 = sand.u32 %s149, 1
        %s272 = smul.addr %s271, 4
        %s273 = scalar_lea.vmem [#allocation5], %s272
        %s274 = smul.u32 2, %s25
        %s275 = smul.u32 2, %s25
        %p276 = scmp.lt.s32.totalorder %s275, 3
        %s277 = scalar_select %p276, %s275, 3
        %s278 = scalar_lea.vmem %s1, %s277
        %s279 = smul.u32 2, %s25
        %s280 = smul.u32 2, %s25
        %p281 = scmp.lt.s32.totalorder %s280, 3
        %s282 = scalar_select %p281, %s280, 3
        %s283 = scalar_lea.vmem %s2, %s282
        %s284 = smul.u32 2, %s25
        %s285 = smul.u32 2, %s25
        %p286 = scmp.lt.s32.totalorder %s285, 3
        %s287 = scalar_select %p286, %s285, 3
        %s288 = scalar_lea.vmem %s3, %s287
        %s289 = smul.u32 2, %s25
        %s290 = smul.u32 2, %s25
        %v291 = vld [vmem:[%s237] sm:$0xf]
        %v294 = vunpack.c.l.s4 1983009808
        %v295 = vunpack.c.0.s8 %v294
        %v296 = vlaneseq
        %v297 = vshrl.u32 %v296, 7
        %v298 = vsub.s32 %v295, %v297
        %v299 = vrot.slane %v291, %v298
        %v300 = vcombine.high %v299, %v299
        %303 = vrot.lane.b32.xlu0 %v299, 127
        %v304 = vpop.permute.xlu0 %303
        %305 = vrot.lane.b32.xlu0 %v300, 127
        %v306 = vpop.permute.xlu0 %305
        %v307 = vlaneseq
        %v308 = vand.u32 %v307, 127
        %vm309 = vcmp.lt.s32.totalorder %v308, 127
        %v310 = vsel %vm309, %v304, %v306
        %v311 = vsel %vm309, %v306, %v304
        %312 = vrot.lane.b32.xlu0 %v299, 1
        %v313 = vpop.permute.xlu0 %312
        %314 = vrot.lane.b32.xlu0 %v300, 1
        %v315 = vpop.permute.xlu0 %314
        %vm316 = vcmp.lt.s32.totalorder %v308, 1
        %v317 = vsel %vm316, %v313, %v315
        %v318 = vsel %vm316, %v315, %v313
        %v319 = vld [vmem:[%s278] sm:$0x3]
        %v321 = vlaneseq
        %v322 = vshrl.u32 %v321, 7
        %v323 = vsub.s32 0, %v322
        %v324 = vrot.slane %v319, %v323
        %v325 = vlaneseq
        %v326 = vshrl.u32 %v325, 7
        %v327 = vsub.s32 1, %v326
        %v328 = vrot.slane %v319, %v327
        %v329 = vcombine.low %v324, %v328
        %v331 = vunpack.c.l.s4 1983009808
        %v332 = vunpack.c.0.s8 %v331
        %v333 = vlaneseq
        %v334 = vshrl.u32 %v333, 7
        %v335 = vsub.s32 %v332, %v334
        %v336 = vrot.slane %v329, %v335
        %v338 = vmul.f32 %v291, %v336
        %v339 = vld [vmem:[%s283] sm:$0x3]
        %v341 = vlaneseq
        %v342 = vshrl.u32 %v341, 7
        %v343 = vsub.s32 0, %v342
        %v344 = vrot.slane %v339, %v343
        %v345 = vlaneseq
        %v346 = vshrl.u32 %v345, 7
        %v347 = vsub.s32 1, %v346
        %v348 = vrot.slane %v339, %v347
        %v351 = vmul.f32 %v310, %v344
        %v352 = vmul.f32 %v311, %v348
        %v355 = vcombine.low %v351, %v352
        %v357 = vunpack.c.l.s4 1983009808
        %v358 = vunpack.c.0.s8 %v357
        %v359 = vlaneseq
        %v360 = vshrl.u32 %v359, 7
        %v361 = vsub.s32 %v358, %v360
        %v362 = vrot.slane %v355, %v361
        %v364 = vadd.f32 %v338, %v362
        %v365 = vld [vmem:[%s288] sm:$0x3]
        %v367 = vlaneseq
        %v368 = vshrl.u32 %v367, 7
        %v369 = vsub.s32 0, %v368
        %v370 = vrot.slane %v365, %v369
        %v371 = vlaneseq
        %v372 = vshrl.u32 %v371, 7
        %v373 = vsub.s32 1, %v372
        %v374 = vrot.slane %v365, %v373
        %v377 = vmul.f32 %v318, %v370
        %v378 = vmul.f32 %v317, %v374
        %v381 = vcombine.low %v377, %v378
        %v383 = vunpack.c.l.s4 1983009808
        %v384 = vunpack.c.0.s8 %v383
        %v385 = vlaneseq
        %v386 = vshrl.u32 %v385, 7
        %v387 = vsub.s32 %v384, %v386
        %v388 = vrot.slane %v381, %v387
        %v390 = vadd.f32 %v364, %v388
        %391 = vst [vmem:[%s273] sm:$0xf] %v390
        %s392 = sand.u32 %s149, 1
        %s393 = scalar_lea.sflag [#allocation4], %s392
        %s394 = sand.u32 %s149, 1
        %s395 = smul.addr %s394, 4
        %s396 = scalar_lea.vmem [#allocation5], %s395
        // Predicated region
        $region41: #{tpu_custom_call.1} parent=35 // pred_check
          %p397 = pneg %p159
        $region42: #{tpu_custom_call.1} parent=35 // pred_check_branch
          %399 = sbr.rel (%p397) target = $region44
        $region43: #{tpu_custom_call.1} parent=35 // pred_region
          %s400 = smul.u32 2, %s25
          %s402 = ssub.s32 64, 64
          %403 = vsyncadd %s393, %s402
          %s404 = smul.addr %s26, 4
          %s405 = sadd.s32 %s400, %s404
          %s406 = smul.addr %s405, 32
          %s407 = scalar_lea.hbm %s4, %s406
          %s409 = sshll.u32 %s396, 4
          %s410 = int_to_ptr.vmem [resolvable:$true] %s409
          %412 = dma.vmem_to_hbm [thread:$0]  %s410, 64, %s407, %s393
        $region44: #{tpu_custom_call.1} parent=35 // pred_fallthru
          _
      $region36: #{tpu_custom_call.1} parent=5 // pred_fallthru
        _
      %p413 = scmp.le.s32.totalorder 2, %s16
      // Predicated region
      $region45: #{tpu_custom_call.1} parent=5 // pred_check
        %p414 = pneg %p413
      $region46: #{tpu_custom_call.1} parent=5 // pred_check_branch
        %416 = sbr.rel (%p414) target = $region48
      $region47: #{tpu_custom_call.1} parent=5 // pred_region
        %s417 = ssub.s32 %s16, 2
        // Predicated region
        $region49: #{tpu_custom_call.1} parent=47 // pred_check
          %p418 = pneg %p165
        $region50: #{tpu_custom_call.1} parent=47 // pred_check_branch
          %420 = sbr.rel (%p418) target = $region52
        $region51: #{tpu_custom_call.1} parent=47 // pred_region
          %s421 = sand.u32 %s150, 1
          %s422 = scalar_lea.sflag [#allocation4], %s421
          %s423 = sand.u32 %s150, 1
          %s424 = smul.addr %s423, 4
          %s425 = scalar_lea.vmem [#allocation5], %s424
          %426 = dma.done %s422, 64
        $region52: #{tpu_custom_call.1} parent=47 // pred_fallthru
          _
      $region48: #{tpu_custom_call.1} parent=5 // pred_fallthru
        _
    $region6: #{tpu_custom_call.1} parent=1 // loop_footer
      %s20 = sadd.s32 1, %s16
    $region7: #{tpu_custom_call.1} parent=1 // loop_footer_branch
      %15 = sbr.rel target = $region3
    $region8: #{tpu_custom_call.1} parent=1 // loop_exit
      _
    %427 = vsyncpa [#allocation3], 1
    %s428 = scalar_lea.sflag [#allocation3], 1
    %429 = vsyncpa %s428, 1
    %430 = vsyncpa [#allocation4], 1
    %s431 = scalar_lea.sflag [#allocation4], 1
    %432 = vsyncpa %s431, 1

</llo_original>
